<compile_context>
chip_gen: v5e
topology: v5e:2x2
jax: 0.10.0
libtpu: 0.0.40
codegen_flags: <defaults>
</compile_context>

<pallas_src>
import functools
import math

import jax
import jax.numpy as jnp
from jax import lax
from jax.experimental import pallas as pl
from jax.experimental.pallas import tpu as pltpu


def _block_ids(shape, axis, block):
    """floor(iota(axis) / block) built from compares + adds.

    Avoids vector integer division (keeps lowering trivially supported);
    block count is small (<= 16) so this unrolls to a handful of VPU ops.
    """
    idx = lax.broadcasted_iota(jnp.int32, shape, axis)
    out = jnp.zeros(shape, jnp.int32)
    for t in range(block, shape[axis], block):
        out = out + (idx >= t).astype(jnp.int32)
    return out


def _ncc_kernel(i_ref, j_ref, out_ref, *, G, H, W, pad, inv_wv, eps, n_valid):
    GH = G * H
    W5 = 5 * W

    I = i_ref[...]            # (GH, W) f32 : G images stacked along rows
    J = j_ref[...]

    # ---- banded block-diagonal box-filter matrices, generated in-kernel ----
    # A_blk[a, b] = 1 iff rows a, b belong to the same image and |a - b| <= pad
    r = lax.broadcasted_iota(jnp.int32, (GH, GH), 0)
    c = lax.broadcasted_iota(jnp.int32, (GH, GH), 1)
    same_img = _block_ids((GH, GH), 0, H) == _block_ids((GH, GH), 1, H)
    A_blk = ((jnp.abs(r - c) <= pad) & same_img).astype(jnp.float32)

    # B_blk[a, b] = 1 iff cols a, b belong to the same operand and |a-b| <= pad
    r2 = lax.broadcasted_iota(jnp.int32, (W5, W5), 0)
    c2 = lax.broadcasted_iota(jnp.int32, (W5, W5), 1)
    same_op = _block_ids((W5, W5), 0, W) == _block_ids((W5, W5), 1, W)
    B_blk = ((jnp.abs(r2 - c2) <= pad) & same_op).astype(jnp.float32)

    # ---- fused 5-operand box filter: exactly two MXU matmuls per step ----
    X5 = jnp.concatenate([I, J, I * I, J * J, I * J], axis=1)      # (GH, 5W)
    T = jnp.dot(A_blk, X5, preferred_element_type=jnp.float32)     # row filter
    U = jnp.dot(T, B_blk, preferred_element_type=jnp.float32)      # col filter

    I_sum = U[:, 0 * W:1 * W]
    J_sum = U[:, 1 * W:2 * W]

    inv = jnp.float32(inv_wv)
    e = jnp.float32(eps)

    # Order keeps peak live (GH, W) temporaries low for larger tiles.
    I_var = jnp.maximum(U[:, 2 * W:3 * W] - I_sum * I_sum * inv, e)
    J_var = jnp.maximum(U[:, 3 * W:4 * W] - J_sum * J_sum * inv, e)
    denom = lax.rsqrt(I_var * J_var)                               # EUP slot
    cross = jnp.maximum(U[:, 4 * W:5 * W] - I_sum * J_sum * inv, e)
    cc = cross * denom

    # Mask rows coming from zero-padded images (N not a multiple of G).
    base_img = pl.program_id(0) * G
    row_img = _block_ids((GH, W), 0, H)
    valid = (base_img + row_img) < n_valid
    s = jnp.sum(jnp.where(valid, cc, 0.0))

    # Lane-dense (8,128) per-step sum slab -> unmasked vst; host reads [:,0,0].
    out_ref[0] = jnp.full((8, 128), s, dtype=jnp.float32)


def _pick_group(N, H):
    """Images per grid step."""
    # Target a ~128-256 deep row-filter contraction without letting the
    # in-kernel (G*H, G*H) block-diagonal matrix get large.
    g = max(1, 256 // max(H, 1))
    g = min(g, 16, max(N, 1))
    # Keep >= 2 grid steps when N >= 2 so both v7x TensorCores get work.
    if N >= 2:
        g = min(g, max(1, (N + 1) // 2))
    # (8,128) layout rule: block row count G*H must be a multiple of 8.
    need = 8 // math.gcd(H, 8)
    g = max(need, (g // need) * need)
    return g


def ncc_pallas(I, J, windows_size=11):
    """I, J: (N, 1, H, W) float32. Returns scalar -mean(local NCC)."""
    assert I.shape == J.shape and I.shape[1] == 1, "dim=2, (N,1,H,W) only"
    N, _, H, W = I.shape
    ws = windows_size
    pad = ws // 2

    G = _pick_group(N, H)
    steps = pl.cdiv(N, G)
    n_pad = steps * G

    # (N,1,H,W) -> (N*H, W): free reshape, no host-side spatial padding needed.
    I2d = I[:, 0].reshape(N * H, W)
    J2d = J[:, 0].reshape(N * H, W)
    if n_pad != N:
        extra = (n_pad - N) * H
        I2d = jnp.pad(I2d, ((0, extra), (0, 0)))
        J2d = jnp.pad(J2d, ((0, extra), (0, 0)))

    kernel = functools.partial(
        _ncc_kernel, G=G, H=H, W=W, pad=pad,
        inv_wv=1.0 / float(ws ** 2), eps=1e-4, n_valid=N)

    sums = pl.pallas_call(
        kernel,
        out_shape=jax.ShapeDtypeStruct((steps, 8, 128), jnp.float32),
        grid=(steps,),
        in_specs=[
            pl.BlockSpec((G * H, W), lambda b: (b, 0)),
            pl.BlockSpec((G * H, W), lambda b: (b, 0)),
        ],
        out_specs=pl.BlockSpec((1, 8, 128), lambda b: (b, 0, 0)),
        compiler_params=pltpu.CompilerParams(
            dimension_semantics=("parallel",)),
    )(I2d, J2d)

    total = jnp.sum(sums[:, 0, 0])
    return -total / jnp.float32(N * H * W)


def ncc_reference(I, J, windows_size=11):
    """Pure-JAX reference replicating the PyTorch forward (for verification)."""
    ws = windows_size
    p = ws // 2
    filt = jnp.ones((1, 1, ws, ws), jnp.float32)

    def conv(x):
        return lax.conv_general_dilated(
            x, filt, window_strides=(1, 1), padding=[(p, p), (p, p)],
            dimension_numbers=("NCHW", "OIHW", "NCHW"))

    wv = float(ws * ws)
    I_sum, J_sum = conv(I), conv(J)
    I2_sum, J2_sum, IJ_sum = conv(I * I), conv(J * J), conv(I * J)
    cross = jnp.maximum(IJ_sum - I_sum * J_sum / wv, 1e-4)
    I_var = jnp.maximum(I2_sum - I_sum ** 2 / wv, 1e-4)
    J_var = jnp.maximum(J2_sum - J_sum ** 2 / wv, 1e-4)
    cc = cross / jnp.sqrt(I_var * J_var)
    return -jnp.mean(cc)


if __name__ == "__main__":
    key = jax.random.PRNGKey(0)
    k1, k2 = jax.random.split(key)
    N, C, H, W = 8, 1, 16, 16
    I = jax.random.uniform(k1, (N, C, H, W), dtype=jnp.float32)
    J = jax.random.uniform(k2, (N, C, H, W), dtype=jnp.float32)

    fn = jax.jit(ncc_pallas, static_argnames=("windows_size",))
    out = jax.block_until_ready(fn(I, J, windows_size=11))

    ref = ncc_reference(I, J, windows_size=11)
    assert jnp.allclose(out, ref, rtol=1e-4, atol=1e-4), (out, ref)

    print("KERNEL_OK")
</pallas_src>

<mosaic_0001>
module attributes {stable_mosaic.version = 11 : i64} {
  func.func @_ncc_kernel(%arg0: i32, %arg1: memref<64x16xf32, #tpu.memory_space<vmem>>, %arg2: memref<64x16xf32, #tpu.memory_space<vmem>>, %arg3: memref<1x8x128xf32, #tpu.memory_space<vmem>>) attributes {dimension_semantics = [#tpu.dimension_semantics<parallel>], iteration_bounds = array<i64: 2>, scalar_prefetch = 0 : i64, scratch_operands = 0 : i64, tpu.core_type = #tpu.core_type<tc>, window_params = [{transform_indices = @transform_0, window_bounds = array<i64: 64, 16>}, {transform_indices = @transform_1, window_bounds = array<i64: 64, 16>}, {transform_indices = @transform_2, window_bounds = array<i64: 1, 8, 128>}]} {
    %c0 = arith.constant 0 : index
    %c0_0 = arith.constant 0 : index
    %0 = vector.load %arg1[%c0, %c0_0] : memref<64x16xf32, #tpu.memory_space<vmem>>, vector<64x16xf32>
    %c0_1 = arith.constant 0 : index
    %c0_2 = arith.constant 0 : index
    %1 = vector.load %arg2[%c0_1, %c0_2] : memref<64x16xf32, #tpu.memory_space<vmem>>, vector<64x16xf32>
    %2 = tpu.iota {dimensions = array<i32: 0>} : vector<64x64xi32>
    %3 = tpu.iota {dimensions = array<i32: 1>} : vector<64x64xi32>
    %4 = tpu.iota {dimensions = array<i32: 0>} : vector<64x64xi32>
    %c0_i32 = arith.constant 0 : i32
    %5 = vector.broadcast %c0_i32 : i32 to vector<64x64xi32>
    %c16_i32 = arith.constant 16 : i32
    %6 = vector.broadcast %c16_i32 : i32 to vector<64x64xi32>
    %7 = arith.cmpi sge, %4, %6 : vector<64x64xi32>
    %8 = arith.extui %7 : vector<64x64xi1> to vector<64x64xi32>
    %9 = arith.addi %5, %8 : vector<64x64xi32>
    %c32_i32 = arith.constant 32 : i32
    %10 = vector.broadcast %c32_i32 : i32 to vector<64x64xi32>
    %11 = arith.cmpi sge, %4, %10 : vector<64x64xi32>
    %12 = arith.extui %11 : vector<64x64xi1> to vector<64x64xi32>
    %13 = arith.addi %9, %12 : vector<64x64xi32>
    %c48_i32 = arith.constant 48 : i32
    %14 = vector.broadcast %c48_i32 : i32 to vector<64x64xi32>
    %15 = arith.cmpi sge, %4, %14 : vector<64x64xi32>
    %16 = arith.extui %15 : vector<64x64xi1> to vector<64x64xi32>
    %17 = arith.addi %13, %16 : vector<64x64xi32>
    %18 = tpu.iota {dimensions = array<i32: 1>} : vector<64x64xi32>
    %c0_i32_3 = arith.constant 0 : i32
    %19 = vector.broadcast %c0_i32_3 : i32 to vector<64x64xi32>
    %c16_i32_4 = arith.constant 16 : i32
    %20 = vector.broadcast %c16_i32_4 : i32 to vector<64x64xi32>
    %21 = arith.cmpi sge, %18, %20 : vector<64x64xi32>
    %22 = arith.extui %21 : vector<64x64xi1> to vector<64x64xi32>
    %23 = arith.addi %19, %22 : vector<64x64xi32>
    %c32_i32_5 = arith.constant 32 : i32
    %24 = vector.broadcast %c32_i32_5 : i32 to vector<64x64xi32>
    %25 = arith.cmpi sge, %18, %24 : vector<64x64xi32>
    %26 = arith.extui %25 : vector<64x64xi1> to vector<64x64xi32>
    %27 = arith.addi %23, %26 : vector<64x64xi32>
    %c48_i32_6 = arith.constant 48 : i32
    %28 = vector.broadcast %c48_i32_6 : i32 to vector<64x64xi32>
    %29 = arith.cmpi sge, %18, %28 : vector<64x64xi32>
    %30 = arith.extui %29 : vector<64x64xi1> to vector<64x64xi32>
    %31 = arith.addi %27, %30 : vector<64x64xi32>
    %32 = arith.cmpi eq, %17, %31 : vector<64x64xi32>
    %33 = arith.subi %2, %3 : vector<64x64xi32>
    %34 = math.absi %33 : vector<64x64xi32>
    %c5_i32 = arith.constant 5 : i32
    %35 = vector.broadcast %c5_i32 : i32 to vector<64x64xi32>
    %36 = arith.cmpi sle, %34, %35 : vector<64x64xi32>
    %37 = arith.andi %36, %32 : vector<64x64xi1>
    %38 = arith.extui %37 : vector<64x64xi1> to vector<64x64xi32>
    %39 = arith.sitofp %38 : vector<64x64xi32> to vector<64x64xf32>
    %40 = tpu.iota {dimensions = array<i32: 0>} : vector<80x80xi32>
    %41 = tpu.iota {dimensions = array<i32: 1>} : vector<80x80xi32>
    %42 = tpu.iota {dimensions = array<i32: 0>} : vector<80x80xi32>
    %c0_i32_7 = arith.constant 0 : i32
    %43 = vector.broadcast %c0_i32_7 : i32 to vector<80x80xi32>
    %c16_i32_8 = arith.constant 16 : i32
    %44 = vector.broadcast %c16_i32_8 : i32 to vector<80x80xi32>
    %45 = arith.cmpi sge, %42, %44 : vector<80x80xi32>
    %46 = arith.extui %45 : vector<80x80xi1> to vector<80x80xi32>
    %47 = arith.addi %43, %46 : vector<80x80xi32>
    %c32_i32_9 = arith.constant 32 : i32
    %48 = vector.broadcast %c32_i32_9 : i32 to vector<80x80xi32>
    %49 = arith.cmpi sge, %42, %48 : vector<80x80xi32>
    %50 = arith.extui %49 : vector<80x80xi1> to vector<80x80xi32>
    %51 = arith.addi %47, %50 : vector<80x80xi32>
    %c48_i32_10 = arith.constant 48 : i32
    %52 = vector.broadcast %c48_i32_10 : i32 to vector<80x80xi32>
    %53 = arith.cmpi sge, %42, %52 : vector<80x80xi32>
    %54 = arith.extui %53 : vector<80x80xi1> to vector<80x80xi32>
    %55 = arith.addi %51, %54 : vector<80x80xi32>
    %c64_i32 = arith.constant 64 : i32
    %56 = vector.broadcast %c64_i32 : i32 to vector<80x80xi32>
    %57 = arith.cmpi sge, %42, %56 : vector<80x80xi32>
    %58 = arith.extui %57 : vector<80x80xi1> to vector<80x80xi32>
    %59 = arith.addi %55, %58 : vector<80x80xi32>
    %60 = tpu.iota {dimensions = array<i32: 1>} : vector<80x80xi32>
    %c0_i32_11 = arith.constant 0 : i32
    %61 = vector.broadcast %c0_i32_11 : i32 to vector<80x80xi32>
    %c16_i32_12 = arith.constant 16 : i32
    %62 = vector.broadcast %c16_i32_12 : i32 to vector<80x80xi32>
    %63 = arith.cmpi sge, %60, %62 : vector<80x80xi32>
    %64 = arith.extui %63 : vector<80x80xi1> to vector<80x80xi32>
    %65 = arith.addi %61, %64 : vector<80x80xi32>
    %c32_i32_13 = arith.constant 32 : i32
    %66 = vector.broadcast %c32_i32_13 : i32 to vector<80x80xi32>
    %67 = arith.cmpi sge, %60, %66 : vector<80x80xi32>
    %68 = arith.extui %67 : vector<80x80xi1> to vector<80x80xi32>
    %69 = arith.addi %65, %68 : vector<80x80xi32>
    %c48_i32_14 = arith.constant 48 : i32
    %70 = vector.broadcast %c48_i32_14 : i32 to vector<80x80xi32>
    %71 = arith.cmpi sge, %60, %70 : vector<80x80xi32>
    %72 = arith.extui %71 : vector<80x80xi1> to vector<80x80xi32>
    %73 = arith.addi %69, %72 : vector<80x80xi32>
    %c64_i32_15 = arith.constant 64 : i32
    %74 = vector.broadcast %c64_i32_15 : i32 to vector<80x80xi32>
    %75 = arith.cmpi sge, %60, %74 : vector<80x80xi32>
    %76 = arith.extui %75 : vector<80x80xi1> to vector<80x80xi32>
    %77 = arith.addi %73, %76 : vector<80x80xi32>
    %78 = arith.cmpi eq, %59, %77 : vector<80x80xi32>
    %79 = arith.subi %40, %41 : vector<80x80xi32>
    %80 = math.absi %79 : vector<80x80xi32>
    %c5_i32_16 = arith.constant 5 : i32
    %81 = vector.broadcast %c5_i32_16 : i32 to vector<80x80xi32>
    %82 = arith.cmpi sle, %80, %81 : vector<80x80xi32>
    %83 = arith.andi %82, %78 : vector<80x80xi1>
    %84 = arith.extui %83 : vector<80x80xi1> to vector<80x80xi32>
    %85 = arith.sitofp %84 : vector<80x80xi32> to vector<80x80xf32>
    %86 = arith.mulf %0, %0 : vector<64x16xf32>
    %87 = arith.mulf %1, %1 : vector<64x16xf32>
    %88 = arith.mulf %0, %1 : vector<64x16xf32>
    %89 = tpu.concatenate %0, %1, %86, %87, %88 in 1 : vector<64x16xf32>, vector<64x16xf32>, vector<64x16xf32>, vector<64x16xf32>, vector<64x16xf32> -> vector<64x80xf32>
    %cst = arith.constant dense<0.000000e+00> : vector<64x80xf32>
    %90 = tpu.matmul %39, %89, %cst {dimension_numbers = #tpu.dot_dimension_numbers<[1], [0], [0], [1], [0, 0, 1, 1], [], []>} : vector<64x64xf32>, vector<64x80xf32>, vector<64x80xf32> -> vector<64x80xf32>
    %cst_17 = arith.constant dense<0.000000e+00> : vector<64x80xf32>
    %91 = tpu.matmul %90, %85, %cst_17 {dimension_numbers = #tpu.dot_dimension_numbers<[1], [0], [0], [1], [0, 0, 1, 1], [], []>} : vector<64x80xf32>, vector<80x80xf32>, vector<64x80xf32> -> vector<64x80xf32>
    %92 = vector.extract_strided_slice %91 {offsets = [0, 0], sizes = [64, 16], strides = [1, 1]} : vector<64x80xf32> to vector<64x16xf32>
    %93 = vector.extract_strided_slice %91 {offsets = [0, 16], sizes = [64, 16], strides = [1, 1]} : vector<64x80xf32> to vector<64x16xf32>
    %94 = vector.extract_strided_slice %91 {offsets = [0, 32], sizes = [64, 16], strides = [1, 1]} : vector<64x80xf32> to vector<64x16xf32>
    %95 = arith.mulf %92, %92 : vector<64x16xf32>
    %cst_18 = arith.constant 0.00826446246 : f32
    %96 = vector.broadcast %cst_18 : f32 to vector<64x16xf32>
    %97 = arith.mulf %95, %96 : vector<64x16xf32>
    %98 = arith.subf %94, %97 : vector<64x16xf32>
    %cst_19 = arith.constant 9.99999974E-5 : f32
    %99 = vector.broadcast %cst_19 : f32 to vector<64x16xf32>
    %100 = arith.maximumf %98, %99 : vector<64x16xf32>
    %101 = vector.extract_strided_slice %91 {offsets = [0, 48], sizes = [64, 16], strides = [1, 1]} : vector<64x80xf32> to vector<64x16xf32>
    %102 = arith.mulf %93, %93 : vector<64x16xf32>
    %cst_20 = arith.constant 0.00826446246 : f32
    %103 = vector.broadcast %cst_20 : f32 to vector<64x16xf32>
    %104 = arith.mulf %102, %103 : vector<64x16xf32>
    %105 = arith.subf %101, %104 : vector<64x16xf32>
    %cst_21 = arith.constant 9.99999974E-5 : f32
    %106 = vector.broadcast %cst_21 : f32 to vector<64x16xf32>
    %107 = arith.maximumf %105, %106 : vector<64x16xf32>
    %108 = arith.mulf %100, %107 : vector<64x16xf32>
    %109 = math.rsqrt %108 : vector<64x16xf32>
    %110 = vector.extract_strided_slice %91 {offsets = [0, 64], sizes = [64, 16], strides = [1, 1]} : vector<64x80xf32> to vector<64x16xf32>
    %111 = arith.mulf %92, %93 : vector<64x16xf32>
    %cst_22 = arith.constant 0.00826446246 : f32
    %112 = vector.broadcast %cst_22 : f32 to vector<64x16xf32>
    %113 = arith.mulf %111, %112 : vector<64x16xf32>
    %114 = arith.subf %110, %113 : vector<64x16xf32>
    %cst_23 = arith.constant 9.99999974E-5 : f32
    %115 = vector.broadcast %cst_23 : f32 to vector<64x16xf32>
    %116 = arith.maximumf %114, %115 : vector<64x16xf32>
    %117 = arith.mulf %116, %109 : vector<64x16xf32>
    %c4_i32 = arith.constant 4 : i32
    %118 = arith.muli %arg0, %c4_i32 : i32
    %119 = tpu.iota {dimensions = array<i32: 0>} : vector<64x16xi32>
    %c0_i32_24 = arith.constant 0 : i32
    %120 = vector.broadcast %c0_i32_24 : i32 to vector<64x16xi32>
    %c16_i32_25 = arith.constant 16 : i32
    %121 = vector.broadcast %c16_i32_25 : i32 to vector<64x16xi32>
    %122 = arith.cmpi sge, %119, %121 : vector<64x16xi32>
    %123 = arith.extui %122 : vector<64x16xi1> to vector<64x16xi32>
    %124 = arith.addi %120, %123 : vector<64x16xi32>
    %c32_i32_26 = arith.constant 32 : i32
    %125 = vector.broadcast %c32_i32_26 : i32 to vector<64x16xi32>
    %126 = arith.cmpi sge, %119, %125 : vector<64x16xi32>
    %127 = arith.extui %126 : vector<64x16xi1> to vector<64x16xi32>
    %128 = arith.addi %124, %127 : vector<64x16xi32>
    %c48_i32_27 = arith.constant 48 : i32
    %129 = vector.broadcast %c48_i32_27 : i32 to vector<64x16xi32>
    %130 = arith.cmpi sge, %119, %129 : vector<64x16xi32>
    %131 = arith.extui %130 : vector<64x16xi1> to vector<64x16xi32>
    %132 = arith.addi %128, %131 : vector<64x16xi32>
    %133 = vector.broadcast %118 : i32 to vector<64x16xi32>
    %134 = arith.addi %133, %132 : vector<64x16xi32>
    %c8_i32 = arith.constant 8 : i32
    %135 = vector.broadcast %c8_i32 : i32 to vector<64x16xi32>
    %136 = arith.cmpi slt, %134, %135 : vector<64x16xi32>
    %cst_28 = arith.constant 0.000000e+00 : f32
    %137 = vector.broadcast %cst_28 : f32 to vector<64x16xf32>
    %138 = arith.select %136, %117, %137 : vector<64x16xi1>, vector<64x16xf32>
    %139 = vector.shape_cast %138 : vector<64x16xf32> to vector<1x64x16xf32>
    %cst_29 = arith.constant dense<0.000000e+00> : vector<1xf32>
    %140 = vector.multi_reduction <add>, %139, %cst_29 [1, 2] : vector<1x64x16xf32> to vector<1xf32>
    %141 = vector.shape_cast %140 : vector<1xf32> to vector<1x1x1xf32>
    %142 = vector.extract %141[0, 0, 0] : f32 from vector<1x1x1xf32>
    %143 = vector.broadcast %142 : f32 to vector<8x128xf32>
    %c0_30 = arith.constant 0 : index
    %c0_31 = arith.constant 0 : index
    %c0_32 = arith.constant 0 : index
    %144 = vector.load %arg3[%c0_30, %c0_31, %c0_32] : memref<1x8x128xf32, #tpu.memory_space<vmem>>, vector<1x8x128xf32>
    %145 = vector.shape_cast %144 : vector<1x8x128xf32> to vector<8x128xf32>
    %146 = vector.shape_cast %143 : vector<8x128xf32> to vector<1x8x128xf32>
    tpu.vector_store %arg3[%c0_30, %c0_31, %c0_32], %146 {strides = array<i32>} : memref<1x8x128xf32, #tpu.memory_space<vmem>>, vector<1x8x128xf32>,
    return
  }
  func.func @transform_0(%arg0: i32) -> (i32, i32) {
    %c0_i32 = arith.constant 0 : i32
    %c0_i32_0 = arith.constant 0 : i32
    return %arg0, %c0_i32 : i32, i32
  }
  func.func @transform_1(%arg0: i32) -> (i32, i32) {
    %c0_i32 = arith.constant 0 : i32
    %c0_i32_0 = arith.constant 0 : i32
    return %arg0, %c0_i32 : i32, i32
  }
  func.func @transform_2(%arg0: i32) -> (i32, i32, i32) {
    %c0_i32 = arith.constant 0 : i32
    %c0_i32_0 = arith.constant 0 : i32
    %c0_i32_1 = arith.constant 0 : i32
    return %arg0, %c0_i32, %c0_i32_0 : i32, i32, i32
  }
}

</mosaic_0001>

<llo_original>
// kernel: ncc_pallas.1
$region0: #{ncc_pallas.1}
  #allocation0 [shape = 'u32[]', space=smem, size = 0x4, offset = 0x4, fixed_abs, tag = 'smem constant byte address 0x4 - core index']
  #allocation1 [shape = 'u32[72,128]{1,0:T(1,128)}', space=vmem, size = 0x9000, scoped, tag = 'internal scratch']
  %s0 = inlined_call_operand.hbm [shape: f32[128,16], index: 0, kind: input, shape index: {}]
  %s1 = inlined_call_operand.hbm [shape: f32[128,16], index: 1, kind: input, shape index: {}]
  %s2 = inlined_call_operand.vmem [shape: f32[2,8,128], index: 2, kind: output, shape index: {}]
  %s3 = sld [smem:[#allocation0]]
  $region49: #{ncc_pallas.1} parent=0
    _
  %s5 = ssub.s32 1, %s3
  %s6 = scalar_select 0, %s5, %s3
  $region1: #{ncc_pallas.1} parent=0
    #allocation2 [shape = 'u8[65536]{0}', space=vmem, size = 0x10000, scoped, tag = 'input window, operand 0']
    #allocation3 [shape = 's32[2]{0}', space=sflag, size = 0x8, scoped, tag = 'scoped memory for ncc_pallas.1']
    #allocation4 [shape = 'u8[65536]{0}', space=vmem, size = 0x10000, scoped, tag = 'input window, operand 1']
    #allocation5 [shape = 's32[2]{0}', space=sflag, size = 0x8, scoped, tag = 'scoped memory for ncc_pallas.1']
    %7 = vsyncpa [#allocation3], 0
    %s8 = scalar_lea.sflag [#allocation3], 1
    %9 = vsyncpa %s8, 0
    %10 = vsyncpa [#allocation5], 0
    %s11 = scalar_lea.sflag [#allocation5], 1
    %12 = vsyncpa %s11, 0
    loop: start=0, step=1, limit=4
    $region2: #{ncc_pallas.1} parent=1 // loop_pre_header
      _
    $region3: #{ncc_pallas.1} parent=1 // loop_header
      %s14 = sphi 0, %s18
      %p15 = scmp.ge.s32.totalorder %s14, 4
      %s24 = sphi 0, %s26
      %s27 = sphi 0, %s24
      %s28 = sphi 0, %s27
      %s44 = sphi 0, %s28
      %s50 = sphi 0, %s52
      %s53 = sphi 0, %s50
      %s54 = sphi 0, %s53
      %s70 = sphi 0, %s54
      %s76 = sphi 0, %s78
      %s79 = sphi 0, %s76
      %s80 = sphi 0, %s79
      %s96 = sphi 0, %s80
    $region4: #{ncc_pallas.1} parent=1 // loop_header_branch
      %17 = sbr.rel (%p15) target = $region8
    $region5: #{ncc_pallas.1} parent=1 // loop_body
      %s19 = ssub.s32 %s14, 1
      %s20 = ssub.s32 %s14, 2
      %s21 = sadd.s32 %s14, 1
      %s22 = ssub.s32 %s14, %s21
      %p23 = scmp.eq.s32.totalorder %s22, 0
      %s25 = sadd.s32 %s24, 1
      %s26 = scalar_select %p23, %s24, %s25
      %p29 = pneg %p23
      %p30 = scmp.eq.s32.totalorder %s14, 1
      %p31 = por %p29, %p30
      %p32 = scmp.ne.s32.totalorder %s24, %s27
      %p33 = scmp.eq.s32.totalorder %s14, 0
      %p34 = por %p32, %p33
      %p35 = scmp.ne.s32.totalorder %s24, %s27
      %p36 = scmp.eq.s32.totalorder %s19, 1
      %p37 = por %p35, %p36
      %p38 = scmp.ne.s32.totalorder %s27, %s28
      %p39 = scmp.eq.s32.totalorder %s19, 0
      %p40 = por %p38, %p39
      %p41 = scmp.ne.s32.totalorder %s27, %s28
      %p42 = scmp.eq.s32.totalorder %s20, 1
      %p43 = por %p41, %p42
      %p45 = scmp.ne.s32.totalorder %s28, %s44
      %p46 = scmp.eq.s32.totalorder %s20, 0
      %p47 = por %p45, %p46
      %s48 = ssub.s32 %s14, %s21
      %p49 = scmp.eq.s32.totalorder %s48, 0
      %s51 = sadd.s32 %s50, 1
      %s52 = scalar_select %p49, %s50, %s51
      %p55 = pneg %p49
      %p56 = scmp.eq.s32.totalorder %s14, 1
      %p57 = por %p55, %p56
      %p58 = scmp.ne.s32.totalorder %s50, %s53
      %p59 = scmp.eq.s32.totalorder %s14, 0
      %p60 = por %p58, %p59
      %p61 = scmp.ne.s32.totalorder %s50, %s53
      %p62 = scmp.eq.s32.totalorder %s19, 1
      %p63 = por %p61, %p62
      %p64 = scmp.ne.s32.totalorder %s53, %s54
      %p65 = scmp.eq.s32.totalorder %s19, 0
      %p66 = por %p64, %p65
      %p67 = scmp.ne.s32.totalorder %s53, %s54
      %p68 = scmp.eq.s32.totalorder %s20, 1
      %p69 = por %p67, %p68
      %p71 = scmp.ne.s32.totalorder %s54, %s70
      %p72 = scmp.eq.s32.totalorder %s20, 0
      %p73 = por %p71, %p72
      %s74 = ssub.s32 %s14, %s21
      %p75 = scmp.eq.s32.totalorder %s74, 0
      %s77 = sadd.s32 %s76, 1
      %s78 = scalar_select %p75, %s76, %s77
      %p81 = pneg %p75
      %p82 = scmp.eq.s32.totalorder %s14, 1
      %p83 = por %p81, %p82
      %p84 = scmp.ne.s32.totalorder %s76, %s79
      %p85 = scmp.eq.s32.totalorder %s14, 0
      %p86 = por %p84, %p85
      %p87 = scmp.ne.s32.totalorder %s76, %s79
      %p88 = scmp.eq.s32.totalorder %s19, 1
      %p89 = por %p87, %p88
      %p90 = scmp.ne.s32.totalorder %s79, %s80
      %p91 = scmp.eq.s32.totalorder %s19, 0
      %p92 = por %p90, %p91
      %p93 = scmp.ne.s32.totalorder %s79, %s80
      %p94 = scmp.eq.s32.totalorder %s20, 1
      %p95 = por %p93, %p94
      %p97 = scmp.ne.s32.totalorder %s80, %s96
      %p98 = scmp.eq.s32.totalorder %s20, 0
      %p99 = por %p97, %p98
      %p100 = scmp.le.s32.totalorder 1, %s14
      %p101 = scmp.lt.s32.totalorder %s14, 3
      %p102 = pnand %p100, %p101
      %p103 = pneg %p102
      // Predicated region
      $region9: #{ncc_pallas.1} parent=5 // pred_check
        _
      $region10: #{ncc_pallas.1} parent=5 // pred_check_branch
        %105 = sbr.rel (%p102) target = $region12
      $region11: #{ncc_pallas.1} parent=5 // pred_region
        %s106 = ssub.s32 %s14, 1
      $region12: #{ncc_pallas.1} parent=5 // pred_fallthru
        _
      %p107 = scmp.lt.s32.totalorder %s14, 2
      // Predicated region
      $region13: #{ncc_pallas.1} parent=5 // pred_check
        %p108 = pneg %p107
      $region14: #{ncc_pallas.1} parent=5 // pred_check_branch
        %110 = sbr.rel (%p108) target = $region16
      $region15: #{ncc_pallas.1} parent=5 // pred_region
        // Predicated region
        $region17: #{ncc_pallas.1} parent=15 // pred_check
          %p111 = pneg %p34
        $region18: #{ncc_pallas.1} parent=15 // pred_check_branch
          %113 = sbr.rel (%p111) target = $region20
        $region19: #{ncc_pallas.1} parent=15 // pred_region
          %s114 = sand.u32 %s24, 1
          %s115 = scalar_lea.sflag [#allocation3], %s114
          %s116 = sand.u32 %s24, 1
          %s117 = smul.addr %s116, 64
          %s118 = scalar_lea.vmem [#allocation2], %s117
          %s119 = smul.u32 8, %s14
          %121 = vsyncadd %s115, 0
          %s122 = smul.addr %s119, 8
          %s123 = scalar_lea.hbm %s0, %s122
          %s124 = sshll.u32 %s123, 4
          %s125 = int_to_ptr.hbm [resolvable:$true] %s124
          %s126 = sshll.u32 %s118, 4
          %s127 = int_to_ptr.vmem [resolvable:$true] %s126
          %132 = dma.hbm_to_vmem [thread:$0]  %s125, 1024, %s127, %s115, 128, 128, 8
        $region20: #{ncc_pallas.1} parent=15 // pred_fallthru
          _
        // Predicated region
        $region21: #{ncc_pallas.1} parent=15 // pred_check
          %p133 = pneg %p60
        $region22: #{ncc_pallas.1} parent=15 // pred_check_branch
          %135 = sbr.rel (%p133) target = $region24
        $region23: #{ncc_pallas.1} parent=15 // pred_region
          %s136 = sand.u32 %s50, 1
          %s137 = scalar_lea.sflag [#allocation5], %s136
          %s138 = sand.u32 %s50, 1
          %s139 = smul.addr %s138, 64
          %s140 = scalar_lea.vmem [#allocation4], %s139
          %s141 = smul.u32 8, %s14
          %143 = vsyncadd %s137, 0
          %s144 = smul.addr %s141, 8
          %s145 = scalar_lea.hbm %s1, %s144
          %s146 = sshll.u32 %s145, 4
          %s147 = int_to_ptr.hbm [resolvable:$true] %s146
          %s148 = sshll.u32 %s140, 4
          %s149 = int_to_ptr.vmem [resolvable:$true] %s148
          %154 = dma.hbm_to_vmem [thread:$0]  %s147, 1024, %s149, %s137, 128, 128, 8
        $region24: #{ncc_pallas.1} parent=15 // pred_fallthru
          _
      $region16: #{ncc_pallas.1} parent=5 // pred_fallthru
        _
      %p155 = scmp.le.s32.totalorder 1, %s14
      %p156 = scmp.lt.s32.totalorder %s14, 3
      %p157 = pnand %p155, %p156
      %p158 = pneg %p157
      // Predicated region
      $region25: #{ncc_pallas.1} parent=5 // pred_check
        _
      $region26: #{ncc_pallas.1} parent=5 // pred_check_branch
        %160 = sbr.rel (%p157) target = $region28
      $region27: #{ncc_pallas.1} parent=5 // pred_region
        %s161 = ssub.s32 %s14, 1
        %s162 = sand.u32 %s27, 1
        %s163 = scalar_lea.sflag [#allocation3], %s162
        %s164 = sand.u32 %s27, 1
        %s165 = smul.addr %s164, 64
        %s166 = scalar_lea.vmem [#allocation2], %s165
        // Predicated region
        $region29: #{ncc_pallas.1} parent=27 // pred_check
          %p167 = pneg %p40
        $region30: #{ncc_pallas.1} parent=27 // pred_check_branch
          %169 = sbr.rel (%p167) target = $region32
        $region31: #{ncc_pallas.1} parent=27 // pred_region
          %171 = dma.done %s163, 1024
        $region32: #{ncc_pallas.1} parent=27 // pred_fallthru
          _
        %s172 = sand.u32 %s53, 1
        %s173 = scalar_lea.sflag [#allocation5], %s172
        %s174 = sand.u32 %s53, 1
        %s175 = smul.addr %s174, 64
        %s176 = scalar_lea.vmem [#allocation4], %s175
        // Predicated region
        $region33: #{ncc_pallas.1} parent=27 // pred_check
          %p177 = pneg %p66
        $region34: #{ncc_pallas.1} parent=27 // pred_check_branch
          %179 = sbr.rel (%p177) target = $region36
        $region35: #{ncc_pallas.1} parent=27 // pred_region
          %181 = dma.done %s173, 1024
        $region36: #{ncc_pallas.1} parent=27 // pred_fallthru
          _
        %s182 = sand.u32 %s27, 1
        %s183 = scalar_lea.sflag [#allocation3], %s182
        %s184 = sand.u32 %s27, 1
        %s185 = smul.addr %s184, 64
        %s186 = scalar_lea.vmem [#allocation2], %s185
        %p187 = pneg %p40
        %p188 = pneg %p37
        %s189 = sand.u32 %s53, 1
        %s190 = scalar_lea.sflag [#allocation5], %s189
        %s191 = sand.u32 %s53, 1
        %s192 = smul.addr %s191, 64
        %s193 = scalar_lea.vmem [#allocation4], %s192
        %p194 = pneg %p66
        %p195 = pneg %p63
        %p196 = pneg %p92
        %p197 = pneg %p89
        %p198 = scmp.lt.s32.totalorder %s19, 1
        %s199 = scalar_select %p198, %s19, 1
        %s200 = smul.addr %s199, 8
        %s201 = scalar_lea.vmem %s2, %s200
        %s202 = smul.u32 8, %s19
        %s203 = smul.u32 8, %s19
        %p204 = scmp.lt.s32.totalorder %s19, 1
        %s205 = scalar_select %p204, %s19, 1
        %s206 = smul.addr %s205, 8
        %s207 = scalar_lea.vmem %s2, %s206
        %v208 = vld [vmem:[%s166] sm:$0xff]
        %v209 = vld [vmem:[%s166 + $0x8] sm:$0xff]
        %v210 = vld [vmem:[%s166 + $0x10] sm:$0xff]
        %v211 = vld [vmem:[%s166 + $0x18] sm:$0xff]
        %v212 = vld [vmem:[%s166 + $0x20] sm:$0xff]
        %v213 = vld [vmem:[%s166 + $0x28] sm:$0xff]
        %v214 = vld [vmem:[%s166 + $0x30] sm:$0xff]
        %v215 = vld [vmem:[%s166 + $0x38] sm:$0xff]
        %v216 = vld [vmem:[%s176] sm:$0xff]
        %v217 = vld [vmem:[%s176 + $0x8] sm:$0xff]
        %v218 = vld [vmem:[%s176 + $0x10] sm:$0xff]
        %v219 = vld [vmem:[%s176 + $0x18] sm:$0xff]
        %v220 = vld [vmem:[%s176 + $0x20] sm:$0xff]
        %v221 = vld [vmem:[%s176 + $0x28] sm:$0xff]
        %v222 = vld [vmem:[%s176 + $0x30] sm:$0xff]
        %v223 = vld [vmem:[%s176 + $0x38] sm:$0xff]
        %v224 = vlaneseq
        %v225 = vshrl.u32 %v224, 7
        %v226 = vadd.s32 %v225, 8
        %v227 = vadd.s32 %v225, 16
        %v228 = vadd.s32 %v225, 24
        %v229 = vadd.s32 %v225, 32
        %v230 = vadd.s32 %v225, 40
        %v231 = vadd.s32 %v225, 48
        %v232 = vadd.s32 %v225, 56
        %v233 = vlaneseq
        %v234 = vand.u32 %v233, 127
        %vm235 = vcmp.ge.s32.totalorder %v225, 16
        %vm236 = vcmp.ge.s32.totalorder %v226, 16
        %vm237 = vcmp.ge.s32.totalorder %v227, 16
        %vm238 = vcmp.ge.s32.totalorder %v228, 16
        %vm239 = vcmp.ge.s32.totalorder %v229, 16
        %vm240 = vcmp.ge.s32.totalorder %v230, 16
        %vm241 = vcmp.ge.s32.totalorder %v231, 16
        %vm242 = vcmp.ge.s32.totalorder %v232, 16
        %v243 = vsel %vm235, 1, 0
        %v244 = vsel %vm236, 1, 0
        %v245 = vsel %vm237, 1, 0
        %v246 = vsel %vm238, 1, 0
        %v247 = vsel %vm239, 1, 0
        %v248 = vsel %vm240, 1, 0
        %v249 = vsel %vm241, 1, 0
        %v250 = vsel %vm242, 1, 0
        %vm251 = vcmp.ge.s32.totalorder %v225, 32
        %vm252 = vcmp.ge.s32.totalorder %v226, 32
        %vm253 = vcmp.ge.s32.totalorder %v227, 32
        %vm254 = vcmp.ge.s32.totalorder %v228, 32
        %vm255 = vcmp.ge.s32.totalorder %v229, 32
        %vm256 = vcmp.ge.s32.totalorder %v230, 32
        %vm257 = vcmp.ge.s32.totalorder %v231, 32
        %vm258 = vcmp.ge.s32.totalorder %v232, 32
        %v259 = vsel %vm251, 1, 0
        %v260 = vsel %vm252, 1, 0
        %v261 = vsel %vm253, 1, 0
        %v262 = vsel %vm254, 1, 0
        %v263 = vsel %vm255, 1, 0
        %v264 = vsel %vm256, 1, 0
        %v265 = vsel %vm257, 1, 0
        %v266 = vsel %vm258, 1, 0
        %v267 = vadd.s32 %v243, %v259
        %v268 = vadd.s32 %v244, %v260
        %v269 = vadd.s32 %v245, %v261
        %v270 = vadd.s32 %v246, %v262
        %v271 = vadd.s32 %v247, %v263
        %v272 = vadd.s32 %v248, %v264
        %v273 = vadd.s32 %v249, %v265
        %v274 = vadd.s32 %v250, %v266
        %vm275 = vcmp.ge.s32.totalorder %v225, 48
        %vm276 = vcmp.ge.s32.totalorder %v226, 48
        %vm277 = vcmp.ge.s32.totalorder %v227, 48
        %vm278 = vcmp.ge.s32.totalorder %v228, 48
        %vm279 = vcmp.ge.s32.totalorder %v229, 48
        %vm280 = vcmp.ge.s32.totalorder %v230, 48
        %vm281 = vcmp.ge.s32.totalorder %v231, 48
        %vm282 = vcmp.ge.s32.totalorder %v232, 48
        %v283 = vsel %vm275, 1, 0
        %v284 = vsel %vm276, 1, 0
        %v285 = vsel %vm277, 1, 0
        %v286 = vsel %vm278, 1, 0
        %v287 = vsel %vm279, 1, 0
        %v288 = vsel %vm280, 1, 0
        %v289 = vsel %vm281, 1, 0
        %v290 = vsel %vm282, 1, 0
        %v291 = vadd.s32 %v267, %v283
        %v292 = vadd.s32 %v268, %v284
        %v293 = vadd.s32 %v269, %v285
        %v294 = vadd.s32 %v270, %v286
        %v295 = vadd.s32 %v271, %v287
        %v296 = vadd.s32 %v272, %v288
        %v297 = vadd.s32 %v273, %v289
        %v298 = vadd.s32 %v274, %v290
        %vm299 = vcmp.ge.s32.totalorder %v234, 16
        %v300 = vsel %vm299, 1, 0
        %vm301 = vcmp.ge.s32.totalorder %v234, 32
        %v302 = vsel %vm301, 1, 0
        %v303 = vadd.s32 %v300, %v302
        %vm304 = vcmp.ge.s32.totalorder %v234, 48
        %v305 = vsel %vm304, 1, 0
        %v306 = vadd.s32 %v303, %v305
        %vm307 = vcmp.eq.s32.totalorder %v291, %v306
        %vm308 = vcmp.eq.s32.totalorder %v292, %v306
        %vm309 = vcmp.eq.s32.totalorder %v293, %v306
        %vm310 = vcmp.eq.s32.totalorder %v294, %v306
        %vm311 = vcmp.eq.s32.totalorder %v295, %v306
        %vm312 = vcmp.eq.s32.totalorder %v296, %v306
        %vm313 = vcmp.eq.s32.totalorder %v297, %v306
        %vm314 = vcmp.eq.s32.totalorder %v298, %v306
        %v315 = vsub.s32 %v225, %v234
        %v316 = vsub.s32 %v226, %v234
        %v317 = vsub.s32 %v227, %v234
        %v318 = vsub.s32 %v228, %v234
        %v319 = vsub.s32 %v229, %v234
        %v320 = vsub.s32 %v230, %v234
        %v321 = vsub.s32 %v231, %v234
        %v322 = vsub.s32 %v232, %v234
        %vm323 = vcmp.lt.s32.totalorder %v315, 0
        %v324 = vsub.s32 0, %v315
        %v325 = vsel %vm323, %v324, %v315
        %vm326 = vcmp.lt.s32.totalorder %v316, 0
        %v327 = vsub.s32 0, %v316
        %v328 = vsel %vm326, %v327, %v316
        %vm329 = vcmp.lt.s32.totalorder %v317, 0
        %v330 = vsub.s32 0, %v317
        %v331 = vsel %vm329, %v330, %v317
        %vm332 = vcmp.lt.s32.totalorder %v318, 0
        %v333 = vsub.s32 0, %v318
        %v334 = vsel %vm332, %v333, %v318
        %vm335 = vcmp.lt.s32.totalorder %v319, 0
        %v336 = vsub.s32 0, %v319
        %v337 = vsel %vm335, %v336, %v319
        %vm338 = vcmp.lt.s32.totalorder %v320, 0
        %v339 = vsub.s32 0, %v320
        %v340 = vsel %vm338, %v339, %v320
        %vm341 = vcmp.lt.s32.totalorder %v321, 0
        %v342 = vsub.s32 0, %v321
        %v343 = vsel %vm341, %v342, %v321
        %vm344 = vcmp.lt.s32.totalorder %v322, 0
        %v345 = vsub.s32 0, %v322
        %v346 = vsel %vm344, %v345, %v322
        %vm347 = vcmp.le.s32.totalorder %v325, 5
        %vm348 = vcmp.le.s32.totalorder %v328, 5
        %vm349 = vcmp.le.s32.totalorder %v331, 5
        %vm350 = vcmp.le.s32.totalorder %v334, 5
        %vm351 = vcmp.le.s32.totalorder %v337, 5
        %vm352 = vcmp.le.s32.totalorder %v340, 5
        %vm353 = vcmp.le.s32.totalorder %v343, 5
        %vm354 = vcmp.le.s32.totalorder %v346, 5
        %vm355 = vmand %vm347, %vm307
        %vm356 = vmand %vm348, %vm308
        %vm357 = vmand %vm349, %vm309
        %vm358 = vmand %vm350, %vm310
        %vm359 = vmand %vm351, %vm311
        %vm360 = vmand %vm352, %vm312
        %vm361 = vmand %vm353, %vm313
        %vm362 = vmand %vm354, %vm314
        %v363 = vsel %vm355, 1, 0
        %v364 = vsel %vm356, 1, 0
        %v365 = vsel %vm357, 1, 0
        %v366 = vsel %vm358, 1, 0
        %v367 = vsel %vm359, 1, 0
        %v368 = vsel %vm360, 1, 0
        %v369 = vsel %vm361, 1, 0
        %v370 = vsel %vm362, 1, 0
        %v371 = vcvt.s32.f32 %v363
        %v372 = vcvt.s32.f32 %v364
        %v373 = vcvt.s32.f32 %v365
        %v374 = vcvt.s32.f32 %v366
        %v375 = vcvt.s32.f32 %v367
        %v376 = vcvt.s32.f32 %v368
        %v377 = vcvt.s32.f32 %v369
        %v378 = vcvt.s32.f32 %v370
        %v379 = vadd.s32 %v225, 64
        %v380 = vadd.s32 %v225, 72
        %vm381 = vcmp.ge.s32.totalorder %v379, 16
        %vm382 = vcmp.ge.s32.totalorder %v380, 16
        %v383 = vsel %vm381, 1, 0
        %v384 = vsel %vm382, 1, 0
        %vm385 = vcmp.ge.s32.totalorder %v379, 32
        %vm386 = vcmp.ge.s32.totalorder %v380, 32
        %v387 = vsel %vm385, 1, 0
        %v388 = vsel %vm386, 1, 0
        %v389 = vadd.s32 %v383, %v387
        %v390 = vadd.s32 %v384, %v388
        %vm391 = vcmp.ge.s32.totalorder %v379, 48
        %vm392 = vcmp.ge.s32.totalorder %v380, 48
        %v393 = vsel %vm391, 1, 0
        %v394 = vsel %vm392, 1, 0
        %v395 = vadd.s32 %v389, %v393
        %v396 = vadd.s32 %v390, %v394
        %vm397 = vcmp.ge.s32.totalorder %v225, 64
        %vm398 = vcmp.ge.s32.totalorder %v226, 64
        %vm399 = vcmp.ge.s32.totalorder %v227, 64
        %vm400 = vcmp.ge.s32.totalorder %v228, 64
        %vm401 = vcmp.ge.s32.totalorder %v229, 64
        %vm402 = vcmp.ge.s32.totalorder %v230, 64
        %vm403 = vcmp.ge.s32.totalorder %v231, 64
        %vm404 = vcmp.ge.s32.totalorder %v232, 64
        %vm405 = vcmp.ge.s32.totalorder %v379, 64
        %vm406 = vcmp.ge.s32.totalorder %v380, 64
        %v407 = vsel %vm397, 1, 0
        %v408 = vsel %vm398, 1, 0
        %v409 = vsel %vm399, 1, 0
        %v410 = vsel %vm400, 1, 0
        %v411 = vsel %vm401, 1, 0
        %v412 = vsel %vm402, 1, 0
        %v413 = vsel %vm403, 1, 0
        %v414 = vsel %vm404, 1, 0
        %v415 = vsel %vm405, 1, 0
        %v416 = vsel %vm406, 1, 0
        %v417 = vadd.s32 %v291, %v407
        %v418 = vadd.s32 %v292, %v408
        %v419 = vadd.s32 %v293, %v409
        %v420 = vadd.s32 %v294, %v410
        %v421 = vadd.s32 %v295, %v411
        %v422 = vadd.s32 %v296, %v412
        %v423 = vadd.s32 %v297, %v413
        %v424 = vadd.s32 %v298, %v414
        %v425 = vadd.s32 %v395, %v415
        %v426 = vadd.s32 %v396, %v416
        %vm427 = vcmp.ge.s32.totalorder %v234, 64
        %v428 = vsel %vm427, 1, 0
        %v429 = vadd.s32 %v306, %v428
        %vm430 = vcmp.eq.s32.totalorder %v417, %v429
        %vm431 = vcmp.eq.s32.totalorder %v418, %v429
        %vm432 = vcmp.eq.s32.totalorder %v419, %v429
        %vm433 = vcmp.eq.s32.totalorder %v420, %v429
        %vm434 = vcmp.eq.s32.totalorder %v421, %v429
        %vm435 = vcmp.eq.s32.totalorder %v422, %v429
        %vm436 = vcmp.eq.s32.totalorder %v423, %v429
        %vm437 = vcmp.eq.s32.totalorder %v424, %v429
        %vm438 = vcmp.eq.s32.totalorder %v425, %v429
        %vm439 = vcmp.eq.s32.totalorder %v426, %v429
        %v440 = vsub.s32 %v379, %v234
        %v441 = vsub.s32 %v380, %v234
        %vm442 = vcmp.lt.s32.totalorder %v440, 0
        %v443 = vsub.s32 0, %v440
        %v444 = vsel %vm442, %v443, %v440
        %vm445 = vcmp.lt.s32.totalorder %v441, 0
        %v446 = vsub.s32 0, %v441
        %v447 = vsel %vm445, %v446, %v441
        %vm448 = vcmp.le.s32.totalorder %v444, 5
        %vm449 = vcmp.le.s32.totalorder %v447, 5
        %vm450 = vmand %vm347, %vm430
        %vm451 = vmand %vm348, %vm431
        %vm452 = vmand %vm349, %vm432
        %vm453 = vmand %vm350, %vm433
        %vm454 = vmand %vm351, %vm434
        %vm455 = vmand %vm352, %vm435
        %vm456 = vmand %vm353, %vm436
        %vm457 = vmand %vm354, %vm437
        %vm458 = vmand %vm448, %vm438
        %vm459 = vmand %vm449, %vm439
        %v460 = vsel %vm450, 1, 0
        %v461 = vsel %vm451, 1, 0
        %v462 = vsel %vm452, 1, 0
        %v463 = vsel %vm453, 1, 0
        %v464 = vsel %vm454, 1, 0
        %v465 = vsel %vm455, 1, 0
        %v466 = vsel %vm456, 1, 0
        %v467 = vsel %vm457, 1, 0
        %v468 = vsel %vm458, 1, 0
        %v469 = vsel %vm459, 1, 0
        %v470 = vcvt.s32.f32 %v460
        %v471 = vcvt.s32.f32 %v461
        %v472 = vcvt.s32.f32 %v462
        %v473 = vcvt.s32.f32 %v463
        %v474 = vcvt.s32.f32 %v464
        %v475 = vcvt.s32.f32 %v465
        %v476 = vcvt.s32.f32 %v466
        %v477 = vcvt.s32.f32 %v467
        %v478 = vcvt.s32.f32 %v468
        %v479 = vcvt.s32.f32 %v469
        %v480 = vmul.f32 %v208, %v208
        %v481 = vmul.f32 %v209, %v209
        %v482 = vmul.f32 %v210, %v210
        %v483 = vmul.f32 %v211, %v211
        %v484 = vmul.f32 %v212, %v212
        %v485 = vmul.f32 %v213, %v213
        %v486 = vmul.f32 %v214, %v214
        %v487 = vmul.f32 %v215, %v215
        %v488 = vmul.f32 %v216, %v216
        %v489 = vmul.f32 %v217, %v217
        %v490 = vmul.f32 %v218, %v218
        %v491 = vmul.f32 %v219, %v219
        %v492 = vmul.f32 %v220, %v220
        %v493 = vmul.f32 %v221, %v221
        %v494 = vmul.f32 %v222, %v222
        %v495 = vmul.f32 %v223, %v223
        %v496 = vmul.f32 %v208, %v216
        %v497 = vmul.f32 %v209, %v217
        %v498 = vmul.f32 %v210, %v218
        %v499 = vmul.f32 %v211, %v219
        %v500 = vmul.f32 %v212, %v220
        %v501 = vmul.f32 %v213, %v221
        %v502 = vmul.f32 %v214, %v222
        %v503 = vmul.f32 %v215, %v223
        %512 = vrot.lane.b32.xlu0 %v216, 16
        %v513 = vpop.permute.xlu0 %512
        %514 = vrot.lane.b32.xlu0 %v217, 16
        %v515 = vpop.permute.xlu0 %514
        %516 = vrot.lane.b32.xlu0 %v218, 16
        %v517 = vpop.permute.xlu0 %516
        %518 = vrot.lane.b32.xlu0 %v219, 16
        %v519 = vpop.permute.xlu0 %518
        %520 = vrot.lane.b32.xlu0 %v220, 16
        %v521 = vpop.permute.xlu0 %520
        %522 = vrot.lane.b32.xlu0 %v221, 16
        %v523 = vpop.permute.xlu0 %522
        %524 = vrot.lane.b32.xlu0 %v222, 16
        %v525 = vpop.permute.xlu0 %524
        %526 = vrot.lane.b32.xlu0 %v223, 16
        %v527 = vpop.permute.xlu0 %526
        %544 = vrot.lane.b32.xlu0 %v480, 32
        %v545 = vpop.permute.xlu0 %544
        %546 = vrot.lane.b32.xlu0 %v481, 32
        %v547 = vpop.permute.xlu0 %546
        %548 = vrot.lane.b32.xlu0 %v482, 32
        %v549 = vpop.permute.xlu0 %548
        %550 = vrot.lane.b32.xlu0 %v483, 32
        %v551 = vpop.permute.xlu0 %550
        %552 = vrot.lane.b32.xlu0 %v484, 32
        %v553 = vpop.permute.xlu0 %552
        %554 = vrot.lane.b32.xlu0 %v485, 32
        %v555 = vpop.permute.xlu0 %554
        %556 = vrot.lane.b32.xlu0 %v486, 32
        %v557 = vpop.permute.xlu0 %556
        %558 = vrot.lane.b32.xlu0 %v487, 32
        %v559 = vpop.permute.xlu0 %558
        %576 = vrot.lane.b32.xlu0 %v488, 48
        %v577 = vpop.permute.xlu0 %576
        %578 = vrot.lane.b32.xlu0 %v489, 48
        %v579 = vpop.permute.xlu0 %578
        %580 = vrot.lane.b32.xlu0 %v490, 48
        %v581 = vpop.permute.xlu0 %580
        %582 = vrot.lane.b32.xlu0 %v491, 48
        %v583 = vpop.permute.xlu0 %582
        %584 = vrot.lane.b32.xlu0 %v492, 48
        %v585 = vpop.permute.xlu0 %584
        %586 = vrot.lane.b32.xlu0 %v493, 48
        %v587 = vpop.permute.xlu0 %586
        %588 = vrot.lane.b32.xlu0 %v494, 48
        %v589 = vpop.permute.xlu0 %588
        %590 = vrot.lane.b32.xlu0 %v495, 48
        %v591 = vpop.permute.xlu0 %590
        %608 = vrot.lane.b32.xlu0 %v496, 64
        %v609 = vpop.permute.xlu0 %608
        %610 = vrot.lane.b32.xlu0 %v497, 64
        %v611 = vpop.permute.xlu0 %610
        %612 = vrot.lane.b32.xlu0 %v498, 64
        %v613 = vpop.permute.xlu0 %612
        %614 = vrot.lane.b32.xlu0 %v499, 64
        %v615 = vpop.permute.xlu0 %614
        %616 = vrot.lane.b32.xlu0 %v500, 64
        %v617 = vpop.permute.xlu0 %616
        %618 = vrot.lane.b32.xlu0 %v501, 64
        %v619 = vpop.permute.xlu0 %618
        %620 = vrot.lane.b32.xlu0 %v502, 64
        %v621 = vpop.permute.xlu0 %620
        %622 = vrot.lane.b32.xlu0 %v503, 64
        %v623 = vpop.permute.xlu0 %622
        %vm632 = vcmask 130048
        %v633 = vsel %vm632, %v208, %v513
        %v634 = vsel %vm632, %v209, %v515
        %v635 = vsel %vm632, %v210, %v517
        %v636 = vsel %vm632, %v211, %v519
        %v637 = vsel %vm632, %v212, %v521
        %v638 = vsel %vm632, %v213, %v523
        %v639 = vsel %vm632, %v214, %v525
        %v640 = vsel %vm632, %v215, %v527
        %vm641 = vcmask 261120
        %v642 = vsel %vm641, %v633, %v545
        %v643 = vsel %vm641, %v634, %v547
        %v644 = vsel %vm641, %v635, %v549
        %v645 = vsel %vm641, %v636, %v551
        %v646 = vsel %vm641, %v637, %v553
        %v647 = vsel %vm641, %v638, %v555
        %v648 = vsel %vm641, %v639, %v557
        %v649 = vsel %vm641, %v640, %v559
        %vm650 = vcmask 392192
        %v651 = vsel %vm650, %v642, %v577
        %v652 = vsel %vm650, %v643, %v579
        %v653 = vsel %vm650, %v644, %v581
        %v654 = vsel %vm650, %v645, %v583
        %v655 = vsel %vm650, %v646, %v585
        %v656 = vsel %vm650, %v647, %v587
        %v657 = vsel %vm650, %v648, %v589
        %v658 = vsel %vm650, %v649, %v591
        %vm659 = vcmask 523264
        %v660 = vsel %vm659, %v651, %v609
        %v661 = vsel %vm659, %v652, %v611
        %v662 = vsel %vm659, %v653, %v613
        %v663 = vsel %vm659, %v654, %v615
        %v664 = vsel %vm659, %v655, %v617
        %v665 = vsel %vm659, %v656, %v619
        %v666 = vsel %vm659, %v657, %v621
        %v667 = vsel %vm659, %v658, %v623
        %v669 = vsel %vm659, %v371, 0
        %v672 = vsel %vm659, %v372, 0
        %v675 = vsel %vm659, %v373, 0
        %v678 = vsel %vm659, %v374, 0
        %v681 = vsel %vm659, %v375, 0
        %v684 = vsel %vm659, %v376, 0
        %v687 = vsel %vm659, %v377, 0
        %v690 = vsel %vm659, %v378, 0
        %692 = vmatpush.msra.mxu0 0.0
        %693 = vmatpush.msra.mxu0 0.0
        %694 = vmatpush.msra.mxu0 0.0
        %695 = vmatpush.msra.mxu0 0.0
        %696 = vmatpush.msra.mxu0 0.0
        %697 = vmatpush.msra.mxu0 0.0
        %698 = vmatpush.msra.mxu0 0.0
        %699 = vmatpush.msra.mxu0 0.0
        %700 = vmatpush.msra.mxu0 %v667
        %701 = vmatpush.msra.mxu0 %v666
        %702 = vmatpush.msra.mxu0 %v665
        %703 = vmatpush.msra.mxu0 %v664
        %704 = vmatpush.msra.mxu0 %v663
        %705 = vmatpush.msra.mxu0 %v662
        %706 = vmatpush.msra.mxu0 %v661
        %707 = vmatpush.msra.mxu0 %v660
        %708 = vmatmul.f32.gmra.mxu0 %v669
        %v709 = vpop.f32.mrf.mxu0
        %v710 = vadd.f32 0.0, %v709
        %711 = vmatmul.f32.gmra.mxu0 %v672
        %v712 = vpop.f32.mrf.mxu0
        %v713 = vadd.f32 0.0, %v712
        %714 = vmatmul.f32.gmra.mxu0 %v675
        %v715 = vpop.f32.mrf.mxu0
        %v716 = vadd.f32 0.0, %v715
        %717 = vmatmul.f32.gmra.mxu0 %v678
        %v718 = vpop.f32.mrf.mxu0
        %v719 = vadd.f32 0.0, %v718
        %720 = vmatmul.f32.gmra.mxu0 %v681
        %v721 = vpop.f32.mrf.mxu0
        %v722 = vadd.f32 0.0, %v721
        %723 = vmatmul.f32.gmra.mxu0 %v684
        %v724 = vpop.f32.mrf.mxu0
        %v725 = vadd.f32 0.0, %v724
        %726 = vmatmul.f32.gmra.mxu0 %v687
        %v727 = vpop.f32.mrf.mxu0
        %v728 = vadd.f32 0.0, %v727
        %729 = vmatmul.f32.gmra.mxu0 %v690
        %v730 = vpop.f32.mrf.mxu0
        %v731 = vadd.f32 0.0, %v730
        %732 = vdwg.mxu0
        %vm733 = vcmask 654336
        %v735 = vsel %vm733, %v710, 0
        %v738 = vsel %vm733, %v713, 0
        %v741 = vsel %vm733, %v716, 0
        %v744 = vsel %vm733, %v719, 0
        %v747 = vsel %vm733, %v722, 0
        %v750 = vsel %vm733, %v725, 0
        %v753 = vsel %vm733, %v728, 0
        %v756 = vsel %vm733, %v731, 0
        %758 = vmatpush.msra.mxu0 0.0
        %759 = vmatpush.msra.mxu0 0.0
        %760 = vmatpush.msra.mxu0 0.0
        %761 = vmatpush.msra.mxu0 0.0
        %762 = vmatpush.msra.mxu0 0.0
        %763 = vmatpush.msra.mxu0 0.0
        %764 = vmatpush.msra.mxu0 %v479
        %765 = vmatpush.msra.mxu0 %v478
        %766 = vmatpush.msra.mxu0 %v477
        %767 = vmatpush.msra.mxu0 %v476
        %768 = vmatpush.msra.mxu0 %v475
        %769 = vmatpush.msra.mxu0 %v474
        %770 = vmatpush.msra.mxu0 %v473
        %771 = vmatpush.msra.mxu0 %v472
        %772 = vmatpush.msra.mxu0 %v471
        %773 = vmatpush.msra.mxu0 %v470
        %774 = vmatmul.f32.gmra.mxu0 %v735
        %v775 = vpop.f32.mrf.mxu0
        %v776 = vadd.f32 0.0, %v775
        %777 = vmatmul.f32.gmra.mxu0 %v738
        %v778 = vpop.f32.mrf.mxu0
        %v779 = vadd.f32 0.0, %v778
        %780 = vmatmul.f32.gmra.mxu0 %v741
        %v781 = vpop.f32.mrf.mxu0
        %v782 = vadd.f32 0.0, %v781
        %783 = vmatmul.f32.gmra.mxu0 %v744
        %v784 = vpop.f32.mrf.mxu0
        %v785 = vadd.f32 0.0, %v784
        %786 = vmatmul.f32.gmra.mxu0 %v747
        %v787 = vpop.f32.mrf.mxu0
        %v788 = vadd.f32 0.0, %v787
        %789 = vmatmul.f32.gmra.mxu0 %v750
        %v790 = vpop.f32.mrf.mxu0
        %v791 = vadd.f32 0.0, %v790
        %792 = vmatmul.f32.gmra.mxu0 %v753
        %v793 = vpop.f32.mrf.mxu0
        %v794 = vadd.f32 0.0, %v793
        %795 = vmatmul.f32.gmra.mxu0 %v756
        %v796 = vpop.f32.mrf.mxu0
        %v797 = vadd.f32 0.0, %v796
        %798 = vdwg.mxu0
        %v799 = vmul.f32 %v776, %v776
        %v800 = vmul.f32 %v779, %v779
        %v801 = vmul.f32 %v782, %v782
        %v802 = vmul.f32 %v785, %v785
        %v803 = vmul.f32 %v788, %v788
        %v804 = vmul.f32 %v791, %v791
        %v805 = vmul.f32 %v794, %v794
        %v806 = vmul.f32 %v797, %v797
        %v807 = vmul.f32 %v799, 0.008264462
        %v808 = vmul.f32 %v800, 0.008264462
        %v809 = vmul.f32 %v801, 0.008264462
        %v810 = vmul.f32 %v802, 0.008264462
        %v811 = vmul.f32 %v803, 0.008264462
        %v812 = vmul.f32 %v804, 0.008264462
        %v813 = vmul.f32 %v805, 0.008264462
        %v814 = vmul.f32 %v806, 0.008264462
        %823 = vrot.lane.b32.xlu0 %v807, 32
        %v824 = vpop.permute.xlu0 %823
        %825 = vrot.lane.b32.xlu0 %v808, 32
        %v826 = vpop.permute.xlu0 %825
        %827 = vrot.lane.b32.xlu0 %v809, 32
        %v828 = vpop.permute.xlu0 %827
        %829 = vrot.lane.b32.xlu0 %v810, 32
        %v830 = vpop.permute.xlu0 %829
        %831 = vrot.lane.b32.xlu0 %v811, 32
        %v832 = vpop.permute.xlu0 %831
        %833 = vrot.lane.b32.xlu0 %v812, 32
        %v834 = vpop.permute.xlu0 %833
        %835 = vrot.lane.b32.xlu0 %v813, 32
        %v836 = vpop.permute.xlu0 %835
        %837 = vrot.lane.b32.xlu0 %v814, 32
        %v838 = vpop.permute.xlu0 %837
        %v847 = vsub.f32 %v776, %v824
        %v848 = vsub.f32 %v779, %v826
        %v849 = vsub.f32 %v782, %v828
        %v850 = vsub.f32 %v785, %v830
        %v851 = vsub.f32 %v788, %v832
        %v852 = vsub.f32 %v791, %v834
        %v853 = vsub.f32 %v794, %v836
        %v854 = vsub.f32 %v797, %v838
        %v855 = vmax.f32 %v847, 0.0001
        %v856 = vmax.f32 %v848, 0.0001
        %v857 = vmax.f32 %v849, 0.0001
        %v858 = vmax.f32 %v850, 0.0001
        %v859 = vmax.f32 %v851, 0.0001
        %v860 = vmax.f32 %v852, 0.0001
        %v861 = vmax.f32 %v853, 0.0001
        %v862 = vmax.f32 %v854, 0.0001
        %871 = vrot.lane.b32.xlu0 %v855, 112
        %v872 = vpop.permute.xlu0 %871
        %873 = vrot.lane.b32.xlu0 %v856, 112
        %v874 = vpop.permute.xlu0 %873
        %875 = vrot.lane.b32.xlu0 %v857, 112
        %v876 = vpop.permute.xlu0 %875
        %877 = vrot.lane.b32.xlu0 %v858, 112
        %v878 = vpop.permute.xlu0 %877
        %879 = vrot.lane.b32.xlu0 %v859, 112
        %v880 = vpop.permute.xlu0 %879
        %881 = vrot.lane.b32.xlu0 %v860, 112
        %v882 = vpop.permute.xlu0 %881
        %883 = vrot.lane.b32.xlu0 %v861, 112
        %v884 = vpop.permute.xlu0 %883
        %885 = vrot.lane.b32.xlu0 %v862, 112
        %v886 = vpop.permute.xlu0 %885
        %v895 = vmul.f32 %v855, %v872
        %v896 = vmul.f32 %v856, %v874
        %v897 = vmul.f32 %v857, %v876
        %v898 = vmul.f32 %v858, %v878
        %v899 = vmul.f32 %v859, %v880
        %v900 = vmul.f32 %v860, %v882
        %v901 = vmul.f32 %v861, %v884
        %v902 = vmul.f32 %v862, %v886
        %v903 = vrsqrt.pop %v895
        %v904 = vmul.f32 %v903, %v895
        %v905 = vmul.f32 %v904, %v903
        %v906 = vmul.f32 0.5, %v905
        %v907 = vsub.f32 1.5, %v906
        %v908 = vmul.f32 %v903, %v907
        %vm909 = vweird.f32 %v895
        %vm910 = vweird.f32 %v903
        %vm911 = vmor %vm909, %vm910
        %v912 = vsel %vm911, %v903, %v908
        %v913 = vrsqrt.pop %v896
        %v914 = vmul.f32 %v913, %v896
        %v915 = vmul.f32 %v914, %v913
        %v916 = vmul.f32 0.5, %v915
        %v917 = vsub.f32 1.5, %v916
        %v918 = vmul.f32 %v913, %v917
        %vm919 = vweird.f32 %v896
        %vm920 = vweird.f32 %v913
        %vm921 = vmor %vm919, %vm920
        %v922 = vsel %vm921, %v913, %v918
        %v923 = vrsqrt.pop %v897
        %v924 = vmul.f32 %v923, %v897
        %v925 = vmul.f32 %v924, %v923
        %v926 = vmul.f32 0.5, %v925
        %v927 = vsub.f32 1.5, %v926
        %v928 = vmul.f32 %v923, %v927
        %vm929 = vweird.f32 %v897
        %vm930 = vweird.f32 %v923
        %vm931 = vmor %vm929, %vm930
        %v932 = vsel %vm931, %v923, %v928
        %v933 = vrsqrt.pop %v898
        %v934 = vmul.f32 %v933, %v898
        %v935 = vmul.f32 %v934, %v933
        %v936 = vmul.f32 0.5, %v935
        %v937 = vsub.f32 1.5, %v936
        %v938 = vmul.f32 %v933, %v937
        %vm939 = vweird.f32 %v898
        %vm940 = vweird.f32 %v933
        %vm941 = vmor %vm939, %vm940
        %v942 = vsel %vm941, %v933, %v938
        %v943 = vrsqrt.pop %v899
        %v944 = vmul.f32 %v943, %v899
        %v945 = vmul.f32 %v944, %v943
        %v946 = vmul.f32 0.5, %v945
        %v947 = vsub.f32 1.5, %v946
        %v948 = vmul.f32 %v943, %v947
        %vm949 = vweird.f32 %v899
        %vm950 = vweird.f32 %v943
        %vm951 = vmor %vm949, %vm950
        %v952 = vsel %vm951, %v943, %v948
        %v953 = vrsqrt.pop %v900
        %v954 = vmul.f32 %v953, %v900
        %v955 = vmul.f32 %v954, %v953
        %v956 = vmul.f32 0.5, %v955
        %v957 = vsub.f32 1.5, %v956
        %v958 = vmul.f32 %v953, %v957
        %vm959 = vweird.f32 %v900
        %vm960 = vweird.f32 %v953
        %vm961 = vmor %vm959, %vm960
        %v962 = vsel %vm961, %v953, %v958
        %v963 = vrsqrt.pop %v901
        %v964 = vmul.f32 %v963, %v901
        %v965 = vmul.f32 %v964, %v963
        %v966 = vmul.f32 0.5, %v965
        %v967 = vsub.f32 1.5, %v966
        %v968 = vmul.f32 %v963, %v967
        %vm969 = vweird.f32 %v901
        %vm970 = vweird.f32 %v963
        %vm971 = vmor %vm969, %vm970
        %v972 = vsel %vm971, %v963, %v968
        %v973 = vrsqrt.pop %v902
        %v974 = vmul.f32 %v973, %v902
        %v975 = vmul.f32 %v974, %v973
        %v976 = vmul.f32 0.5, %v975
        %v977 = vsub.f32 1.5, %v976
        %v978 = vmul.f32 %v973, %v977
        %vm979 = vweird.f32 %v902
        %vm980 = vweird.f32 %v973
        %vm981 = vmor %vm979, %vm980
        %v982 = vsel %vm981, %v973, %v978
        %991 = vrot.lane.b32.xlu0 %v776, 112
        %v992 = vpop.permute.xlu0 %991
        %993 = vrot.lane.b32.xlu0 %v779, 112
        %v994 = vpop.permute.xlu0 %993
        %995 = vrot.lane.b32.xlu0 %v782, 112
        %v996 = vpop.permute.xlu0 %995
        %997 = vrot.lane.b32.xlu0 %v785, 112
        %v998 = vpop.permute.xlu0 %997
        %999 = vrot.lane.b32.xlu0 %v788, 112
        %v1000 = vpop.permute.xlu0 %999
        %1001 = vrot.lane.b32.xlu0 %v791, 112
        %v1002 = vpop.permute.xlu0 %1001
        %1003 = vrot.lane.b32.xlu0 %v794, 112
        %v1004 = vpop.permute.xlu0 %1003
        %1005 = vrot.lane.b32.xlu0 %v797, 112
        %v1006 = vpop.permute.xlu0 %1005
        %v1015 = vmul.f32 %v776, %v992
        %v1016 = vmul.f32 %v779, %v994
        %v1017 = vmul.f32 %v782, %v996
        %v1018 = vmul.f32 %v785, %v998
        %v1019 = vmul.f32 %v788, %v1000
        %v1020 = vmul.f32 %v791, %v1002
        %v1021 = vmul.f32 %v794, %v1004
        %v1022 = vmul.f32 %v797, %v1006
        %v1023 = vmul.f32 %v1015, 0.008264462
        %v1024 = vmul.f32 %v1016, 0.008264462
        %v1025 = vmul.f32 %v1017, 0.008264462
        %v1026 = vmul.f32 %v1018, 0.008264462
        %v1027 = vmul.f32 %v1019, 0.008264462
        %v1028 = vmul.f32 %v1020, 0.008264462
        %v1029 = vmul.f32 %v1021, 0.008264462
        %v1030 = vmul.f32 %v1022, 0.008264462
        %1039 = vrot.lane.b32.xlu0 %v1023, 64
        %v1040 = vpop.permute.xlu0 %1039
        %1041 = vrot.lane.b32.xlu0 %v1024, 64
        %v1042 = vpop.permute.xlu0 %1041
        %1043 = vrot.lane.b32.xlu0 %v1025, 64
        %v1044 = vpop.permute.xlu0 %1043
        %1045 = vrot.lane.b32.xlu0 %v1026, 64
        %v1046 = vpop.permute.xlu0 %1045
        %1047 = vrot.lane.b32.xlu0 %v1027, 64
        %v1048 = vpop.permute.xlu0 %1047
        %1049 = vrot.lane.b32.xlu0 %v1028, 64
        %v1050 = vpop.permute.xlu0 %1049
        %1051 = vrot.lane.b32.xlu0 %v1029, 64
        %v1052 = vpop.permute.xlu0 %1051
        %1053 = vrot.lane.b32.xlu0 %v1030, 64
        %v1054 = vpop.permute.xlu0 %1053
        %v1063 = vsub.f32 %v776, %v1040
        %v1064 = vsub.f32 %v779, %v1042
        %v1065 = vsub.f32 %v782, %v1044
        %v1066 = vsub.f32 %v785, %v1046
        %v1067 = vsub.f32 %v788, %v1048
        %v1068 = vsub.f32 %v791, %v1050
        %v1069 = vsub.f32 %v794, %v1052
        %v1070 = vsub.f32 %v797, %v1054
        %v1071 = vmax.f32 %v1063, 0.0001
        %v1072 = vmax.f32 %v1064, 0.0001
        %v1073 = vmax.f32 %v1065, 0.0001
        %v1074 = vmax.f32 %v1066, 0.0001
        %v1075 = vmax.f32 %v1067, 0.0001
        %v1076 = vmax.f32 %v1068, 0.0001
        %v1077 = vmax.f32 %v1069, 0.0001
        %v1078 = vmax.f32 %v1070, 0.0001
        %1087 = vrot.lane.b32.xlu0 %v912, 32
        %v1088 = vpop.permute.xlu0 %1087
        %1089 = vrot.lane.b32.xlu0 %v922, 32
        %v1090 = vpop.permute.xlu0 %1089
        %1091 = vrot.lane.b32.xlu0 %v932, 32
        %v1092 = vpop.permute.xlu0 %1091
        %1093 = vrot.lane.b32.xlu0 %v942, 32
        %v1094 = vpop.permute.xlu0 %1093
        %1095 = vrot.lane.b32.xlu0 %v952, 32
        %v1096 = vpop.permute.xlu0 %1095
        %1097 = vrot.lane.b32.xlu0 %v962, 32
        %v1098 = vpop.permute.xlu0 %1097
        %1099 = vrot.lane.b32.xlu0 %v972, 32
        %v1100 = vpop.permute.xlu0 %1099
        %1101 = vrot.lane.b32.xlu0 %v982, 32
        %v1102 = vpop.permute.xlu0 %1101
        %v1111 = vmul.f32 %v1071, %v1088
        %v1112 = vmul.f32 %v1072, %v1090
        %v1113 = vmul.f32 %v1073, %v1092
        %v1114 = vmul.f32 %v1074, %v1094
        %v1115 = vmul.f32 %v1075, %v1096
        %v1116 = vmul.f32 %v1076, %v1098
        %v1117 = vmul.f32 %v1077, %v1100
        %v1118 = vmul.f32 %v1078, %v1102
        %s1119 = smul.u32 %s19, 4
        %v1120 = vstv %s1119
        %v1121 = vadd.s32 %v1120, %v291
        %v1122 = vadd.s32 %v1120, %v292
        %v1123 = vadd.s32 %v1120, %v293
        %v1124 = vadd.s32 %v1120, %v294
        %v1125 = vadd.s32 %v1120, %v295
        %v1126 = vadd.s32 %v1120, %v296
        %v1127 = vadd.s32 %v1120, %v297
        %v1128 = vadd.s32 %v1120, %v298
        %vm1129 = vcmp.lt.s32.totalorder %v1121, 8
        %vm1130 = vcmp.lt.s32.totalorder %v1122, 8
        %vm1131 = vcmp.lt.s32.totalorder %v1123, 8
        %vm1132 = vcmp.lt.s32.totalorder %v1124, 8
        %vm1133 = vcmp.lt.s32.totalorder %v1125, 8
        %vm1134 = vcmp.lt.s32.totalorder %v1126, 8
        %vm1135 = vcmp.lt.s32.totalorder %v1127, 8
        %vm1136 = vcmp.lt.s32.totalorder %v1128, 8
        %v1137 = vsel %vm1129, %v1111, 0.0
        %v1138 = vsel %vm1130, %v1112, 0.0
        %v1139 = vsel %vm1131, %v1113, 0.0
        %v1140 = vsel %vm1132, %v1114, 0.0
        %v1141 = vsel %vm1133, %v1115, 0.0
        %v1142 = vsel %vm1134, %v1116, 0.0
        %v1143 = vsel %vm1135, %v1117, 0.0
        %v1144 = vsel %vm1136, %v1118, 0.0
        %1153 = vrot.lane.b32.xlu0 %v1137, 64
        %v1154 = vpop.permute.xlu0 %1153
        %1155 = vrot.lane.b32.xlu0 %v1138, 64
        %v1156 = vpop.permute.xlu0 %1155
        %1157 = vrot.lane.b32.xlu0 %v1139, 64
        %v1158 = vpop.permute.xlu0 %1157
        %1159 = vrot.lane.b32.xlu0 %v1140, 64
        %v1160 = vpop.permute.xlu0 %1159
        %1161 = vrot.lane.b32.xlu0 %v1141, 64
        %v1162 = vpop.permute.xlu0 %1161
        %1163 = vrot.lane.b32.xlu0 %v1142, 64
        %v1164 = vpop.permute.xlu0 %1163
        %1165 = vrot.lane.b32.xlu0 %v1143, 64
        %v1166 = vpop.permute.xlu0 %1165
        %1167 = vrot.lane.b32.xlu0 %v1144, 64
        %v1168 = vpop.permute.xlu0 %1167
        %v1177 = vsel %vm632, %v1154, 0.0
        %v1178 = vsel %vm632, %v1156, 0.0
        %v1179 = vadd.f32 %v1177, %v1178
        %v1180 = vsel %vm632, %v1158, 0.0
        %v1181 = vadd.f32 %v1179, %v1180
        %v1182 = vsel %vm632, %v1160, 0.0
        %v1183 = vadd.f32 %v1181, %v1182
        %v1184 = vsel %vm632, %v1162, 0.0
        %v1185 = vadd.f32 %v1183, %v1184
        %v1186 = vsel %vm632, %v1164, 0.0
        %v1187 = vadd.f32 %v1185, %v1186
        %v1188 = vsel %vm632, %v1166, 0.0
        %v1189 = vadd.f32 %v1187, %v1188
        %v1190 = vsel %vm632, %v1168, 0.0
        %v1191 = vadd.f32 %v1189, %v1190
        %1192 = vadd.xlane.f32.xlu0 %v1191
        %v1193 = vpop.xlane.xlu0 %1192
        %v1194 = vrot.slane %v1193, 4
        %v1195 = vadd.f32 %v1193, %v1194
        %v1196 = vrot.slane %v1195, 2
        %v1197 = vadd.f32 %v1195, %v1196
        %v1198 = vrot.slane %v1197, 1
        %v1199 = vadd.f32 %v1197, %v1198
        %s1200 = vtos %v1199
        %v1201 = vstv %s1200
        %1202 = vst [vmem:[%s207] sm:$0xff] %v1201
        %p1203 = scmp.lt.s32.totalorder %s19, 1
        %s1204 = scalar_select %p1203, %s19, 1
        %s1205 = smul.addr %s1204, 8
        %s1206 = scalar_lea.vmem %s2, %s1205
        // Predicated region
        $region37: #{ncc_pallas.1} parent=27 // pred_check
          %p1207 = pneg %p89
        $region38: #{ncc_pallas.1} parent=27 // pred_check_branch
          %1209 = sbr.rel (%p1207) target = $region40
        $region39: #{ncc_pallas.1} parent=27 // pred_region
          _
        $region40: #{ncc_pallas.1} parent=27 // pred_fallthru
          _
      $region28: #{ncc_pallas.1} parent=5 // pred_fallthru
        _
      %p1210 = scmp.le.s32.totalorder 2, %s14
      // Predicated region
      $region41: #{ncc_pallas.1} parent=5 // pred_check
        %p1211 = pneg %p1210
      $region42: #{ncc_pallas.1} parent=5 // pred_check_branch
        %1213 = sbr.rel (%p1211) target = $region44
      $region43: #{ncc_pallas.1} parent=5 // pred_region
        %s1214 = ssub.s32 %s14, 2
        // Predicated region
        $region45: #{ncc_pallas.1} parent=43 // pred_check
          %p1215 = pneg %p95
        $region46: #{ncc_pallas.1} parent=43 // pred_check_branch
          %1217 = sbr.rel (%p1215) target = $region48
        $region47: #{ncc_pallas.1} parent=43 // pred_region
          %p1218 = scmp.lt.s32.totalorder %s20, 1
          %s1219 = scalar_select %p1218, %s20, 1
          %s1220 = smul.addr %s1219, 8
          %s1221 = scalar_lea.vmem %s2, %s1220
        $region48: #{ncc_pallas.1} parent=43 // pred_fallthru
          _
      $region44: #{ncc_pallas.1} parent=5 // pred_fallthru
        _
    $region6: #{ncc_pallas.1} parent=1 // loop_footer
      %s18 = sadd.s32 1, %s14
    $region7: #{ncc_pallas.1} parent=1 // loop_footer_branch
      %13 = sbr.rel target = $region3
    $region8: #{ncc_pallas.1} parent=1 // loop_exit
      _
    %1222 = vsyncpa [#allocation3], 1
    %s1223 = scalar_lea.sflag [#allocation3], 1
    %1224 = vsyncpa %s1223, 1
    %1225 = vsyncpa [#allocation5], 1
    %s1226 = scalar_lea.sflag [#allocation5], 1
    %1227 = vsyncpa %s1226, 1

</llo_original>
